<compile_context>
chip_gen: v6e
topology: v6e:2x2x1
jax: 0.10.0
libtpu: 0.0.40
codegen_flags: <defaults>
</compile_context>

<pallas_src>
import jax
import jax.numpy as jnp
import numpy as np
from jax import lax
from jax.experimental import pallas as pl
from jax.experimental.pallas import tpu as pltpu


# ----------------------------- Pallas kernel --------------------------------
def _downsample_kernel(x_ref, w_ref, b_ref, a_ref, o_ref):
    # x_ref: (1, 9*C, Lt)   im2col block (9 taps stacked on the sublane axis)
    # w_ref: (OCt, 9*C)     fused conv weight block
    # b_ref: (OCt, 1)       conv bias (f32)
    # a_ref: (OCt, 1)       PReLU per-channel slope (f32)
    # o_ref: (1, OCt, Lt)   NCHW output block (spatial flattened on lanes)
    acc = jnp.dot(w_ref[...], x_ref[0],
                  preferred_element_type=jnp.float32)          # (OCt, Lt) f32
    acc = acc + b_ref[...]                                     # broadcast over lanes
    o_ref[0] = jnp.where(acc > 0.0, acc, a_ref[...] * acc).astype(o_ref.dtype)


# ------------------------------ wrapper (glue) -------------------------------
@jax.jit
def downsample_forward(x_nchw, conv_w, conv_b, prelu_a):
    """Equivalent of PyTorch: PReLU(Conv2d(x, k=3, s=2, p=1)).

    x_nchw : (N, C, H, W)
    conv_w : (OC, C, 3, 3)   (PyTorch weight layout)
    conv_b : (OC,)
    prelu_a: (OC,)
    returns: (N, OC, Ho, Wo) with Ho = (H-1)//2 + 1, Wo = (W-1)//2 + 1
    """
    N, C, H, W = x_nchw.shape
    OC = conv_w.shape[0]
    Ho = (H - 1) // 2 + 1
    Wo = (W - 1) // 2 + 1
    L = Ho * Wo
    K = 9 * C

    # ---- spatial (lane) tiling: full image if small, else 128-aligned chunks.
    if L <= 512:
        Lt, L_pad = L, L
    else:
        Lt = 512
        L_pad = ((L + Lt - 1) // Lt) * Lt

    # ---- OC tiling: whole OC if it fits the MXU row dim, else 256-wide blocks.
    if OC <= 256:
        OCt, OC_pad = OC, OC
    else:
        OCt = 256
        OC_pad = ((OC + OCt - 1) // OCt) * OCt

    # ---- glue: zero-pad + build 9 per-tap planes, stacked on the contraction.
    # tap (ky, kx): plane[n, c, ho, wo] = x_pad[n, c, 2*ho + ky, 2*wo + kx]
    xp = jnp.pad(x_nchw, ((0, 0), (0, 0), (1, 1), (1, 1)))
    taps = []
    for ky in range(3):
        for kx in range(3):
            taps.append(xp[:, :, ky:ky + 2 * Ho - 1:2, kx:kx + 2 * Wo - 1:2])
    xim = jnp.stack(taps, axis=1).reshape(N, 9, C, L)           # (N, 9, C, L)
    if L_pad > L:
        xim = jnp.pad(xim, ((0, 0), (0, 0), (0, 0), (0, L_pad - L)))
    xim = xim.reshape(N, K, L_pad)                              # (N, 9C, L_pad)

    # (OC, C, 3, 3) -> (OC, ky, kx, C) -> (OC, 9C): matches the tap stacking.
    w9 = jnp.transpose(conv_w, (0, 2, 3, 1)).reshape(OC, K)
    b2 = conv_b.reshape(OC, 1).astype(jnp.float32)
    a2 = prelu_a.reshape(OC, 1).astype(jnp.float32)
    if OC_pad > OC:
        w9 = jnp.pad(w9, ((0, OC_pad - OC), (0, 0)))
        b2 = jnp.pad(b2, ((0, OC_pad - OC), (0, 0)))
        a2 = jnp.pad(a2, ((0, OC_pad - OC), (0, 0)))

    grid = (N, OC_pad // OCt, L_pad // Lt)
    isz = x_nchw.dtype.itemsize
    cost = pl.CostEstimate(
        flops=2 * N * OC * L * K,
        transcendentals=0,
        bytes_accessed=(xim.size + w9.size) * isz
        + (b2.size + a2.size) * 4
        + N * OC_pad * L_pad * isz,
    )

    out = pl.pallas_call(
        _downsample_kernel,
        out_shape=jax.ShapeDtypeStruct((N, OC_pad, L_pad), x_nchw.dtype),
        grid_spec=pltpu.PrefetchScalarGridSpec(
            num_scalar_prefetch=0,
            grid=grid,
            in_specs=[
                pl.BlockSpec((1, K, Lt), lambda n, oi, li: (n, 0, li)),
                pl.BlockSpec((OCt, K), lambda n, oi, li: (oi, 0)),
                pl.BlockSpec((OCt, 1), lambda n, oi, li: (oi, 0)),
                pl.BlockSpec((OCt, 1), lambda n, oi, li: (oi, 0)),
            ],
            out_specs=pl.BlockSpec((1, OCt, Lt), lambda n, oi, li: (n, oi, li)),
        ),
        compiler_params=pltpu.CompilerParams(
            dimension_semantics=("parallel", "parallel", "parallel"),
            vmem_limit_bytes=48 * 1024 * 1024),
        cost_estimate=cost,
    )(xim, w9, b2, a2)

    out = out[:, :OC, :L]                     # drop OC / lane padding (if any)
    return out.reshape(N, OC, Ho, Wo)         # already NCHW; reshape is free


# ------------------------------- reference -----------------------------------
def _reference(x_nchw, conv_w, conv_b, prelu_a):
    y = lax.conv_general_dilated(
        x_nchw, conv_w, window_strides=(2, 2), padding=((1, 1), (1, 1)),
        dimension_numbers=("NCHW", "OIHW", "NCHW"))
    y = y + conv_b.reshape(1, -1, 1, 1)
    a = prelu_a.reshape(1, -1, 1, 1)
    return jnp.where(y > 0, y, a * y)


# --------------------------------- main ---------------------------------------
if __name__ == "__main__":
    key = jax.random.PRNGKey(0)
    k1, k2, k3, k4 = jax.random.split(key, 4)

    N, C, H, W = 2, 4, 16, 16
    OC = 8

    x = jax.random.normal(k1, (N, C, H, W), dtype=jnp.float32)
    fan_in = C * 3 * 3
    bound = 1.0 / np.sqrt(fan_in)
    conv_w = jax.random.uniform(k2, (OC, C, 3, 3), jnp.float32, -bound, bound)
    conv_b = jax.random.uniform(k3, (OC,), jnp.float32, -bound, bound)
    prelu_a = jnp.full((OC,), 0.25, jnp.float32) + \
        0.05 * jax.random.normal(k4, (OC,), jnp.float32)

    out = jax.block_until_ready(downsample_forward(x, conv_w, conv_b, prelu_a))
    ref = jax.block_until_ready(_reference(x, conv_w, conv_b, prelu_a))
    np.testing.assert_allclose(np.asarray(out), np.asarray(ref),
                               rtol=1e-4, atol=1e-4)

    Ho, Wo = (H - 1) // 2 + 1, (W - 1) // 2 + 1
    assert out.shape == (N, OC, Ho, Wo)
    print("KERNEL_OK")
</pallas_src>

<mosaic_0001>
module attributes {stable_mosaic.version = 11 : i64} {
  func.func @_downsample_kernel(%arg0: i32, %arg1: i32, %arg2: i32, %arg3: memref<1x36x64xf32, #tpu.memory_space<vmem>>, %arg4: memref<8x36xf32, #tpu.memory_space<vmem>>, %arg5: memref<8x1xf32, #tpu.memory_space<vmem>>, %arg6: memref<8x1xf32, #tpu.memory_space<vmem>>, %arg7: memref<1x8x64xf32, #tpu.memory_space<vmem>>) attributes {dimension_semantics = [#tpu.dimension_semantics<parallel>, #tpu.dimension_semantics<parallel>, #tpu.dimension_semantics<parallel>], iteration_bounds = array<i64: 2, 1, 1>, scalar_prefetch = 0 : i64, scratch_operands = 0 : i64, tpu.core_type = #tpu.core_type<tc>, window_params = [{transform_indices = @transform_0, window_bounds = array<i64: 1, 36, 64>}, {transform_indices = @transform_1, window_bounds = array<i64: 8, 36>}, {transform_indices = @transform_2, window_bounds = array<i64: 8, 1>}, {transform_indices = @transform_3, window_bounds = array<i64: 8, 1>}, {transform_indices = @transform_4, window_bounds = array<i64: 1, 8, 64>}]} {
    %c0 = arith.constant 0 : index
    %c0_0 = arith.constant 0 : index
    %0 = vector.load %arg4[%c0, %c0_0] : memref<8x36xf32, #tpu.memory_space<vmem>>, vector<8x36xf32>
    %c0_1 = arith.constant 0 : index
    %c0_2 = arith.constant 0 : index
    %c0_3 = arith.constant 0 : index
    %1 = vector.load %arg3[%c0_1, %c0_2, %c0_3] : memref<1x36x64xf32, #tpu.memory_space<vmem>>, vector<1x36x64xf32>
    %2 = vector.shape_cast %1 : vector<1x36x64xf32> to vector<36x64xf32>
    %cst = arith.constant dense<0.000000e+00> : vector<8x64xf32>
    %3 = tpu.matmul %0, %2, %cst {dimension_numbers = #tpu.dot_dimension_numbers<[1], [0], [0], [1], [0, 0, 1, 1], [], []>} : vector<8x36xf32>, vector<36x64xf32>, vector<8x64xf32> -> vector<8x64xf32>
    %c0_4 = arith.constant 0 : index
    %c0_5 = arith.constant 0 : index
    %4 = vector.load %arg5[%c0_4, %c0_5] : memref<8x1xf32, #tpu.memory_space<vmem>>, vector<8x1xf32>
    %5 = vector.broadcast %4 : vector<8x1xf32> to vector<8x64xf32>
    %6 = arith.addf %3, %5 : vector<8x64xf32>
    %cst_6 = arith.constant 0.000000e+00 : f32
    %7 = vector.broadcast %cst_6 : f32 to vector<8x64xf32>
    %8 = arith.cmpf ogt, %6, %7 : vector<8x64xf32>
    %c0_7 = arith.constant 0 : index
    %c0_8 = arith.constant 0 : index
    %9 = vector.load %arg6[%c0_7, %c0_8] : memref<8x1xf32, #tpu.memory_space<vmem>>, vector<8x1xf32>
    %10 = vector.broadcast %9 : vector<8x1xf32> to vector<8x64xf32>
    %11 = arith.mulf %10, %6 : vector<8x64xf32>
    %12 = arith.select %8, %6, %11 : vector<8x64xi1>, vector<8x64xf32>
    %c0_9 = arith.constant 0 : index
    %c0_10 = arith.constant 0 : index
    %c0_11 = arith.constant 0 : index
    %13 = vector.load %arg7[%c0_9, %c0_10, %c0_11] : memref<1x8x64xf32, #tpu.memory_space<vmem>>, vector<1x8x64xf32>
    %14 = vector.shape_cast %13 : vector<1x8x64xf32> to vector<8x64xf32>
    %15 = vector.shape_cast %12 : vector<8x64xf32> to vector<1x8x64xf32>
    tpu.vector_store %arg7[%c0_9, %c0_10, %c0_11], %15 {strides = array<i32>} : memref<1x8x64xf32, #tpu.memory_space<vmem>>, vector<1x8x64xf32>,
    return
  }
  func.func @transform_0(%arg0: i32, %arg1: i32, %arg2: i32) -> (i32, i32, i32) {
    %c0_i32 = arith.constant 0 : i32
    %c0_i32_0 = arith.constant 0 : i32
    return %arg0, %c0_i32, %arg2 : i32, i32, i32
  }
  func.func @transform_1(%arg0: i32, %arg1: i32, %arg2: i32) -> (i32, i32) {
    %c0_i32 = arith.constant 0 : i32
    %c0_i32_0 = arith.constant 0 : i32
    return %arg1, %c0_i32 : i32, i32
  }
  func.func @transform_2(%arg0: i32, %arg1: i32, %arg2: i32) -> (i32, i32) {
    %c0_i32 = arith.constant 0 : i32
    %c0_i32_0 = arith.constant 0 : i32
    return %arg1, %c0_i32 : i32, i32
  }
  func.func @transform_3(%arg0: i32, %arg1: i32, %arg2: i32) -> (i32, i32) {
    %c0_i32 = arith.constant 0 : i32
    %c0_i32_0 = arith.constant 0 : i32
    return %arg1, %c0_i32 : i32, i32
  }
  func.func @transform_4(%arg0: i32, %arg1: i32, %arg2: i32) -> (i32, i32, i32) {
    %c0_i32 = arith.constant 0 : i32
    return %arg0, %arg1, %arg2 : i32, i32, i32
  }
}

</mosaic_0001>

<llo_original>
// kernel: downsample_forward.1
$region0: #{downsample_forward.1}
  #allocation0 [shape = 'u32[]', space=smem, size = 0x4, offset = 0x4, fixed_abs, tag = 'smem constant byte address 0x4 - core index']
  #allocation1 [shape = 'u32[144,128]{1,0:T(1,128)}', space=vmem, size = 0x12000, scoped, tag = 'internal scratch']
  %s0 = inlined_call_operand.vmem [shape: f32[2,36,64], index: 0, kind: input, shape index: {}]
  %s1 = inlined_call_operand.vmem [shape: f32[8,36], index: 1, kind: input, shape index: {}]
  %s2 = inlined_call_operand.vmem [shape: f32[8,1], index: 2, kind: input, shape index: {}]
  %s3 = inlined_call_operand.vmem [shape: f32[8,1], index: 3, kind: input, shape index: {}]
  %s4 = inlined_call_operand.vmem [shape: f32[2,8,64], index: 4, kind: output, shape index: {}]
  %s5 = sld [smem:[#allocation0]]
  $region49: #{downsample_forward.1} parent=0
    _
  %s7 = ssub.s32 1, %s5
  %s8 = scalar_select 0, %s7, %s5
  loop: start=0, step=1, limit=4
  $region2: #{downsample_forward.1} parent=0 // loop_pre_header
    _
  $region3: #{downsample_forward.1} parent=0 // loop_header
    %s10 = sphi 0, %s14
    %p11 = scmp.ge.s32.totalorder %s10, 4
    %s17 = sphi 0, %s36
    %s18 = sphi 0, %s32
    %s19 = sphi 0, %s28
    %s20 = sphi 0, %s17
    %s21 = sphi 0, %s18
    %s22 = sphi 0, %s19
    %s23 = sphi 0, %s20
    %s24 = sphi 0, %s21
    %s25 = sphi 0, %s22
    %s41 = sphi 0, %s43
    %s44 = sphi 0, %s41
    %s45 = sphi 0, %s44
    %s61 = sphi 0, %s45
    %s67 = sphi 0, %s69
    %s70 = sphi 0, %s67
    %s71 = sphi 0, %s70
    %s87 = sphi 0, %s71
    %s93 = sphi 0, %s95
    %s96 = sphi 0, %s93
    %s97 = sphi 0, %s96
    %s113 = sphi 0, %s97
    %s119 = sphi 0, %s121
    %s122 = sphi 0, %s119
    %s123 = sphi 0, %s122
    %s139 = sphi 0, %s123
    %s149 = sphi 0, %s151
    %s152 = sphi 0, %s149
    %s153 = sphi 0, %s152
    %s169 = sphi 0, %s153
  $region4: #{downsample_forward.1} parent=0 // loop_header_branch
    %13 = sbr.rel (%p11) target = $region8
  $region5: #{downsample_forward.1} parent=0 // loop_body
    %s15 = ssub.s32 %s10, 1
    %s16 = ssub.s32 %s10, 2
    %s26 = sadd.s32 1, %s19
    %p27 = scmp.ge.s32.totalorder %s26, 1
    %s28 = scalar_select %p27, 0, %s26
    %s29 = sadd.s32 1, %s18
    %s30 = scalar_select %p27, %s29, %s18
    %p31 = scmp.ge.s32.totalorder %s30, 1
    %s32 = scalar_select %p31, 0, %s30
    %s33 = sadd.s32 1, %s17
    %s34 = scalar_select %p31, %s33, %s17
    %p35 = scmp.ge.s32.totalorder %s34, 2
    %s36 = scalar_select %p35, 0, %s34
    %s37 = ssub.s32 %s17, %s36
    %s38 = ssub.s32 %s19, %s28
    %s39 = sor.u32 %s37, %s38
    %p40 = scmp.eq.s32.totalorder %s39, 0
    %s42 = sadd.s32 %s41, 1
    %s43 = scalar_select %p40, %s41, %s42
    %p46 = pneg %p40
    %p47 = scmp.eq.s32.totalorder %s10, 1
    %p48 = por %p46, %p47
    %p49 = scmp.ne.s32.totalorder %s41, %s44
    %p50 = scmp.eq.s32.totalorder %s10, 0
    %p51 = por %p49, %p50
    %p52 = scmp.ne.s32.totalorder %s41, %s44
    %p53 = scmp.eq.s32.totalorder %s15, 1
    %p54 = por %p52, %p53
    %p55 = scmp.ne.s32.totalorder %s44, %s45
    %p56 = scmp.eq.s32.totalorder %s15, 0
    %p57 = por %p55, %p56
    %p58 = scmp.ne.s32.totalorder %s44, %s45
    %p59 = scmp.eq.s32.totalorder %s16, 1
    %p60 = por %p58, %p59
    %p62 = scmp.ne.s32.totalorder %s45, %s61
    %p63 = scmp.eq.s32.totalorder %s16, 0
    %p64 = por %p62, %p63
    %s65 = ssub.s32 %s18, %s32
    %p66 = scmp.eq.s32.totalorder %s65, 0
    %s68 = sadd.s32 %s67, 1
    %s69 = scalar_select %p66, %s67, %s68
    %p72 = pneg %p66
    %p73 = scmp.eq.s32.totalorder %s10, 1
    %p74 = por %p72, %p73
    %p75 = scmp.ne.s32.totalorder %s67, %s70
    %p76 = scmp.eq.s32.totalorder %s10, 0
    %p77 = por %p75, %p76
    %p78 = scmp.ne.s32.totalorder %s67, %s70
    %p79 = scmp.eq.s32.totalorder %s15, 1
    %p80 = por %p78, %p79
    %p81 = scmp.ne.s32.totalorder %s70, %s71
    %p82 = scmp.eq.s32.totalorder %s15, 0
    %p83 = por %p81, %p82
    %p84 = scmp.ne.s32.totalorder %s70, %s71
    %p85 = scmp.eq.s32.totalorder %s16, 1
    %p86 = por %p84, %p85
    %p88 = scmp.ne.s32.totalorder %s71, %s87
    %p89 = scmp.eq.s32.totalorder %s16, 0
    %p90 = por %p88, %p89
    %s91 = ssub.s32 %s18, %s32
    %p92 = scmp.eq.s32.totalorder %s91, 0
    %s94 = sadd.s32 %s93, 1
    %s95 = scalar_select %p92, %s93, %s94
    %p98 = pneg %p92
    %p99 = scmp.eq.s32.totalorder %s10, 1
    %p100 = por %p98, %p99
    %p101 = scmp.ne.s32.totalorder %s93, %s96
    %p102 = scmp.eq.s32.totalorder %s10, 0
    %p103 = por %p101, %p102
    %p104 = scmp.ne.s32.totalorder %s93, %s96
    %p105 = scmp.eq.s32.totalorder %s15, 1
    %p106 = por %p104, %p105
    %p107 = scmp.ne.s32.totalorder %s96, %s97
    %p108 = scmp.eq.s32.totalorder %s15, 0
    %p109 = por %p107, %p108
    %p110 = scmp.ne.s32.totalorder %s96, %s97
    %p111 = scmp.eq.s32.totalorder %s16, 1
    %p112 = por %p110, %p111
    %p114 = scmp.ne.s32.totalorder %s97, %s113
    %p115 = scmp.eq.s32.totalorder %s16, 0
    %p116 = por %p114, %p115
    %s117 = ssub.s32 %s18, %s32
    %p118 = scmp.eq.s32.totalorder %s117, 0
    %s120 = sadd.s32 %s119, 1
    %s121 = scalar_select %p118, %s119, %s120
    %p124 = pneg %p118
    %p125 = scmp.eq.s32.totalorder %s10, 1
    %p126 = por %p124, %p125
    %p127 = scmp.ne.s32.totalorder %s119, %s122
    %p128 = scmp.eq.s32.totalorder %s10, 0
    %p129 = por %p127, %p128
    %p130 = scmp.ne.s32.totalorder %s119, %s122
    %p131 = scmp.eq.s32.totalorder %s15, 1
    %p132 = por %p130, %p131
    %p133 = scmp.ne.s32.totalorder %s122, %s123
    %p134 = scmp.eq.s32.totalorder %s15, 0
    %p135 = por %p133, %p134
    %p136 = scmp.ne.s32.totalorder %s122, %s123
    %p137 = scmp.eq.s32.totalorder %s16, 1
    %p138 = por %p136, %p137
    %p140 = scmp.ne.s32.totalorder %s123, %s139
    %p141 = scmp.eq.s32.totalorder %s16, 0
    %p142 = por %p140, %p141
    %s143 = ssub.s32 %s17, %s36
    %s144 = ssub.s32 %s18, %s32
    %s145 = sor.u32 %s143, %s144
    %s146 = ssub.s32 %s19, %s28
    %s147 = sor.u32 %s145, %s146
    %p148 = scmp.eq.s32.totalorder %s147, 0
    %s150 = sadd.s32 %s149, 1
    %s151 = scalar_select %p148, %s149, %s150
    %p154 = pneg %p148
    %p155 = scmp.eq.s32.totalorder %s10, 1
    %p156 = por %p154, %p155
    %p157 = scmp.ne.s32.totalorder %s149, %s152
    %p158 = scmp.eq.s32.totalorder %s10, 0
    %p159 = por %p157, %p158
    %p160 = scmp.ne.s32.totalorder %s149, %s152
    %p161 = scmp.eq.s32.totalorder %s15, 1
    %p162 = por %p160, %p161
    %p163 = scmp.ne.s32.totalorder %s152, %s153
    %p164 = scmp.eq.s32.totalorder %s15, 0
    %p165 = por %p163, %p164
    %p166 = scmp.ne.s32.totalorder %s152, %s153
    %p167 = scmp.eq.s32.totalorder %s16, 1
    %p168 = por %p166, %p167
    %p170 = scmp.ne.s32.totalorder %s153, %s169
    %p171 = scmp.eq.s32.totalorder %s16, 0
    %p172 = por %p170, %p171
    %p173 = scmp.le.s32.totalorder 1, %s10
    %p174 = scmp.lt.s32.totalorder %s10, 3
    %p175 = pnand %p173, %p174
    %p176 = pneg %p175
    // Predicated region
    $region9: #{downsample_forward.1} parent=5 // pred_check
      _
    $region10: #{downsample_forward.1} parent=5 // pred_check_branch
      %178 = sbr.rel (%p175) target = $region12
    $region11: #{downsample_forward.1} parent=5 // pred_region
      %s179 = ssub.s32 %s10, 1
      // Predicated region
      $region13: #{downsample_forward.1} parent=11 // pred_check
        %p180 = pneg %p83
      $region14: #{downsample_forward.1} parent=11 // pred_check_branch
        %182 = sbr.rel (%p180) target = $region16
      $region15: #{downsample_forward.1} parent=11 // pred_region
        %p183 = scmp.lt.s32.totalorder %s21, 0
        %s184 = scalar_select %p183, %s21, 0
        %s185 = smul.addr %s184, 8
        %s186 = scalar_lea.vmem %s1, %s185
      $region16: #{downsample_forward.1} parent=11 // pred_fallthru
        _
      // Predicated region
      $region17: #{downsample_forward.1} parent=11 // pred_check
        %p187 = pneg %p109
      $region18: #{downsample_forward.1} parent=11 // pred_check_branch
        %189 = sbr.rel (%p187) target = $region20
      $region19: #{downsample_forward.1} parent=11 // pred_region
        %p190 = scmp.lt.s32.totalorder %s21, 0
        %s191 = scalar_select %p190, %s21, 0
        %s192 = smul.addr %s191, 8
        %s193 = scalar_lea.vmem %s2, %s192
      $region20: #{downsample_forward.1} parent=11 // pred_fallthru
        _
      // Predicated region
      $region21: #{downsample_forward.1} parent=11 // pred_check
        %p194 = pneg %p135
      $region22: #{downsample_forward.1} parent=11 // pred_check_branch
        %196 = sbr.rel (%p194) target = $region24
      $region23: #{downsample_forward.1} parent=11 // pred_region
        %p197 = scmp.lt.s32.totalorder %s21, 0
        %s198 = scalar_select %p197, %s21, 0
        %s199 = smul.addr %s198, 8
        %s200 = scalar_lea.vmem %s3, %s199
      $region24: #{downsample_forward.1} parent=11 // pred_fallthru
        _
    $region12: #{downsample_forward.1} parent=5 // pred_fallthru
      _
    %p201 = scmp.lt.s32.totalorder %s10, 2
    // Predicated region
    $region25: #{downsample_forward.1} parent=5 // pred_check
      %p202 = pneg %p201
    $region26: #{downsample_forward.1} parent=5 // pred_check_branch
      %204 = sbr.rel (%p202) target = $region28
    $region27: #{downsample_forward.1} parent=5 // pred_region
      // Predicated region
      $region29: #{downsample_forward.1} parent=27 // pred_check
        %p205 = pneg %p51
      $region30: #{downsample_forward.1} parent=27 // pred_check_branch
        %207 = sbr.rel (%p205) target = $region32
      $region31: #{downsample_forward.1} parent=27 // pred_region
        %p208 = scmp.lt.s32.totalorder %s17, 1
        %s209 = scalar_select %p208, %s17, 1
        %p210 = scmp.lt.s32.totalorder %s19, 0
        %s211 = scalar_select %p210, %s19, 0
        %s212 = smul.addr %s209, 5
        %s213 = sadd.s32 %s211, %s212
        %s214 = smul.addr %s213, 8
        %s215 = scalar_lea.vmem %s0, %s214
      $region32: #{downsample_forward.1} parent=27 // pred_fallthru
        _
    $region28: #{downsample_forward.1} parent=5 // pred_fallthru
      _
    %p216 = scmp.le.s32.totalorder 1, %s10
    %p217 = scmp.lt.s32.totalorder %s10, 3
    %p218 = pnand %p216, %p217
    %p219 = pneg %p218
    // Predicated region
    $region33: #{downsample_forward.1} parent=5 // pred_check
      _
    $region34: #{downsample_forward.1} parent=5 // pred_check_branch
      %221 = sbr.rel (%p218) target = $region36
    $region35: #{downsample_forward.1} parent=5 // pred_region
      %s222 = ssub.s32 %s10, 1
      %p223 = scmp.lt.s32.totalorder %s20, 1
      %s224 = scalar_select %p223, %s20, 1
      %p225 = scmp.lt.s32.totalorder %s22, 0
      %s226 = scalar_select %p225, %s22, 0
      %s227 = smul.addr %s224, 5
      %s228 = sadd.s32 %s226, %s227
      %s229 = smul.addr %s228, 8
      %s230 = scalar_lea.vmem %s0, %s229
      %p231 = pneg %p57
      %p232 = pneg %p54
      %p233 = scmp.lt.s32.totalorder %s21, 0
      %s234 = scalar_select %p233, %s21, 0
      %s235 = smul.addr %s234, 8
      %s236 = scalar_lea.vmem %s1, %s235
      %p237 = pneg %p83
      %p238 = pneg %p80
      %p239 = scmp.lt.s32.totalorder %s21, 0
      %s240 = scalar_select %p239, %s21, 0
      %s241 = smul.addr %s240, 8
      %s242 = scalar_lea.vmem %s2, %s241
      %p243 = pneg %p109
      %p244 = pneg %p106
      %p245 = scmp.lt.s32.totalorder %s21, 0
      %s246 = scalar_select %p245, %s21, 0
      %s247 = smul.addr %s246, 8
      %s248 = scalar_lea.vmem %s3, %s247
      %p249 = pneg %p135
      %p250 = pneg %p132
      %p251 = pneg %p165
      %p252 = pneg %p162
      %p253 = scmp.lt.s32.totalorder %s20, 1
      %s254 = scalar_select %p253, %s20, 1
      %p255 = scmp.lt.s32.totalorder %s21, 0
      %s256 = scalar_select %p255, %s21, 0
      %p257 = scmp.lt.s32.totalorder %s22, 0
      %s258 = scalar_select %p257, %s22, 0
      %s259 = sadd.s32 %s258, %s256
      %s260 = sadd.s32 %s259, %s254
      %s261 = smul.addr %s260, 8
      %s262 = scalar_lea.vmem %s4, %s261
      %p263 = scmp.lt.s32.totalorder %s20, 1
      %s264 = scalar_select %p263, %s20, 1
      %p265 = scmp.lt.s32.totalorder %s22, 0
      %s266 = scalar_select %p265, %s22, 0
      %s267 = smul.addr %s264, 5
      %s268 = sadd.s32 %s266, %s267
      %s269 = smul.addr %s268, 8
      %s270 = scalar_lea.vmem %s0, %s269
      %p271 = scmp.lt.s32.totalorder %s21, 0
      %s272 = scalar_select %p271, %s21, 0
      %s273 = smul.addr %s272, 8
      %s274 = scalar_lea.vmem %s1, %s273
      %p275 = scmp.lt.s32.totalorder %s21, 0
      %s276 = scalar_select %p275, %s21, 0
      %s277 = smul.addr %s276, 8
      %s278 = scalar_lea.vmem %s2, %s277
      %p279 = scmp.lt.s32.totalorder %s21, 0
      %s280 = scalar_select %p279, %s21, 0
      %s281 = smul.addr %s280, 8
      %s282 = scalar_lea.vmem %s3, %s281
      %p283 = scmp.lt.s32.totalorder %s20, 1
      %s284 = scalar_select %p283, %s20, 1
      %p285 = scmp.lt.s32.totalorder %s21, 0
      %s286 = scalar_select %p285, %s21, 0
      %p287 = scmp.lt.s32.totalorder %s22, 0
      %s288 = scalar_select %p287, %s22, 0
      %s289 = sadd.s32 %s288, %s286
      %s290 = sadd.s32 %s289, %s284
      %s291 = smul.addr %s290, 8
      %s292 = scalar_lea.vmem %s4, %s291
      %v293 = vld [vmem:[%s274] sm:$0xff]
      %v294 = vld [vmem:[%s270] sm:$0xff]
      %v295 = vld [vmem:[%s270 + $0x8] sm:$0xff]
      %v296 = vld [vmem:[%s270 + $0x10] sm:$0xff]
      %v297 = vld [vmem:[%s270 + $0x18] sm:$0xff]
      %v298 = vld [vmem:[%s270 + $0x20] sm:$0xf]
      %v299 = vld [vmem:[%s278] sm:$0xff]
      %301 = vset.pattern.permute.xlu0 0
      %302 = vperm.xlu0 %301, %v299
      %v303 = vpop.permute.xlu0 %302
      %vm305 = vcmask 293888
      %v307 = vsel %vm305, %v293, 0
      %vm309 = vcmask 1043456
      %v311 = vsel %vm309, %v298, 0
      %313 = vmatprep.subr.mxu0 0.0
      %314 = vmatpush1.msra.mxu0 0.0
      %315 = vmatprep.subr.mxu0 0.0
      %316 = vmatpush1.msra.mxu0 0.0
      %317 = vmatprep.subr.mxu0 0.0
      %318 = vmatpush1.msra.mxu0 0.0
      %319 = vmatprep.subr.mxu0 0.0
      %320 = vmatpush1.msra.mxu0 0.0
      %321 = vmatprep.subr.mxu0 0.0
      %322 = vmatpush1.msra.mxu0 0.0
      %323 = vmatprep.subr.mxu0 0.0
      %324 = vmatpush1.msra.mxu0 0.0
      %325 = vmatprep.subr.mxu0 0.0
      %326 = vmatpush1.msra.mxu0 0.0
      %327 = vmatprep.subr.mxu0 0.0
      %328 = vmatpush1.msra.mxu0 0.0
      %329 = vmatprep.subr.mxu0 0.0
      %330 = vmatpush1.msra.mxu0 0.0
      %331 = vmatprep.subr.mxu0 0.0
      %332 = vmatpush1.msra.mxu0 0.0
      %333 = vmatprep.subr.mxu0 0.0
      %334 = vmatpush1.msra.mxu0 0.0
      %335 = vmatprep.subr.mxu0 0.0
      %336 = vmatpush1.msra.mxu0 %v311
      %337 = vmatprep.subr.mxu0 0.0
      %338 = vmatpush1.msra.mxu0 %v297
      %339 = vmatprep.subr.mxu0 0.0
      %340 = vmatpush1.msra.mxu0 %v296
      %341 = vmatprep.subr.mxu0 0.0
      %342 = vmatpush1.msra.mxu0 %v295
      %343 = vmatprep.subr.mxu0 0.0
      %344 = vmatpush1.msra.mxu0 %v294
      %345 = vmatprep.subr.mxu0 0.0
      %346 = vmatpush2.msra.mxu0 0.0
      %347 = vmatprep.subr.mxu0 0.0
      %348 = vmatpush2.msra.mxu0 0.0
      %349 = vmatprep.subr.mxu0 0.0
      %350 = vmatpush2.msra.mxu0 0.0
      %351 = vmatprep.subr.mxu0 0.0
      %352 = vmatpush2.msra.mxu0 0.0
      %353 = vmatprep.subr.mxu0 0.0
      %354 = vmatpush2.msra.mxu0 0.0
      %355 = vmatprep.subr.mxu0 0.0
      %356 = vmatpush2.msra.mxu0 0.0
      %357 = vmatprep.subr.mxu0 0.0
      %358 = vmatpush2.msra.mxu0 0.0
      %359 = vmatprep.subr.mxu0 0.0
      %360 = vmatpush2.msra.mxu0 0.0
      %361 = vmatprep.subr.mxu0 0.0
      %362 = vmatpush2.msra.mxu0 0.0
      %363 = vmatprep.subr.mxu0 0.0
      %364 = vmatpush2.msra.mxu0 0.0
      %365 = vmatprep.subr.mxu0 0.0
      %366 = vmatpush2.msra.mxu0 0.0
      %367 = vmatprep.subr.mxu0 0.0
      %368 = vmatpush2.msra.mxu0 0.0
      %369 = vmatprep.subr.mxu0 0.0
      %370 = vmatpush2.msra.mxu0 0.0
      %371 = vmatprep.subr.mxu0 0.0
      %372 = vmatpush2.msra.mxu0 0.0
      %373 = vmatprep.subr.mxu0 0.0
      %374 = vmatpush2.msra.mxu0 0.0
      %375 = vmatprep.subr.mxu0 0.0
      %376 = vmatpush2.msra.mxu0 0.0
      %377 = vmatprep.mubr.f32.mxu0 0.0
      %378 = vmatmul.mubr.f32.gmra.mxu0 %v307
      %v379 = vpop.f32.mrf.mxu0
      %v380 = vadd.f32 %v303, %v379
      %v381 = vpop.f32.mrf.mxu0
      %382 = vdwg.mxu0
      %vm383 = vcmp.gt.f32.partialorder %v380, 0.0
      %v384 = vld [vmem:[%s282] sm:$0xff]
      %386 = vset.pattern.permute.xlu0 0
      %387 = vperm.xlu0 %386, %v384
      %v388 = vpop.permute.xlu0 %387
      %v390 = vmul.f32 %v388, %v380
      %v391 = vsel %vm383, %v380, %v390
      %vm392 = vcmask 523264
      %393 = vst.msk [vmem:[%s292] sm:$0xff] %vm392, %v391
      %p394 = scmp.lt.s32.totalorder %s20, 1
      %s395 = scalar_select %p394, %s20, 1
      %p396 = scmp.lt.s32.totalorder %s21, 0
      %s397 = scalar_select %p396, %s21, 0
      %p398 = scmp.lt.s32.totalorder %s22, 0
      %s399 = scalar_select %p398, %s22, 0
      %s400 = sadd.s32 %s399, %s397
      %s401 = sadd.s32 %s400, %s395
      %s402 = smul.addr %s401, 8
      %s403 = scalar_lea.vmem %s4, %s402
      // Predicated region
      $region37: #{downsample_forward.1} parent=35 // pred_check
        %p404 = pneg %p162
      $region38: #{downsample_forward.1} parent=35 // pred_check_branch
        %406 = sbr.rel (%p404) target = $region40
      $region39: #{downsample_forward.1} parent=35 // pred_region
        _
      $region40: #{downsample_forward.1} parent=35 // pred_fallthru
        _
    $region36: #{downsample_forward.1} parent=5 // pred_fallthru
      _
    %p407 = scmp.le.s32.totalorder 2, %s10
    // Predicated region
    $region41: #{downsample_forward.1} parent=5 // pred_check
      %p408 = pneg %p407
    $region42: #{downsample_forward.1} parent=5 // pred_check_branch
      %410 = sbr.rel (%p408) target = $region44
    $region43: #{downsample_forward.1} parent=5 // pred_region
      %s411 = ssub.s32 %s10, 2
      // Predicated region
      $region45: #{downsample_forward.1} parent=43 // pred_check
        %p412 = pneg %p168
      $region46: #{downsample_forward.1} parent=43 // pred_check_branch
        %414 = sbr.rel (%p412) target = $region48
      $region47: #{downsample_forward.1} parent=43 // pred_region
        %p415 = scmp.lt.s32.totalorder %s23, 1
        %s416 = scalar_select %p415, %s23, 1
        %p417 = scmp.lt.s32.totalorder %s24, 0
        %s418 = scalar_select %p417, %s24, 0
        %p419 = scmp.lt.s32.totalorder %s25, 0
        %s420 = scalar_select %p419, %s25, 0
        %s421 = sadd.s32 %s420, %s418
        %s422 = sadd.s32 %s421, %s416
        %s423 = smul.addr %s422, 8
        %s424 = scalar_lea.vmem %s4, %s423
      $region48: #{downsample_forward.1} parent=43 // pred_fallthru
        _
    $region44: #{downsample_forward.1} parent=5 // pred_fallthru
      _
  $region6: #{downsample_forward.1} parent=0 // loop_footer
    %s14 = sadd.s32 1, %s10
  $region7: #{downsample_forward.1} parent=0 // loop_footer_branch
    %9 = sbr.rel target = $region3
  $region8: #{downsample_forward.1} parent=0 // loop_exit
    _

</llo_original>
